<compile_context>
chip_gen: v7x
topology: tpu7x:2x2x1
jax: 0.10.0
libtpu: 0.0.40
codegen_flags: <defaults>
</compile_context>

<pallas_src>
import jax
import jax.numpy as jnp
from jax import lax
from jax.experimental import pallas as pl
from jax.experimental.pallas import tpu as pltpu

_BN_EPS = 1e-5  # PyTorch BatchNorm default
_TARGET_X_BYTES = 4 << 20  # aim for ~4 MiB of x per grid step
_MAX_N_BLK = 64            # cap the unrolled in-kernel batch loop


def _vmem_budget():
    """(per-step footprint budget, detected VMEM capacity) in bytes."""
    try:
        cap = int(pltpu.get_tpu_info().vmem_capacity_bytes)
        if cap <= 0:
            raise ValueError("bad vmem capacity")
    except Exception:
        cap = 64 * 1024 * 1024  # conservative (v7x-sized) fallback
    budget = max(int(cap * 0.70), 16 * 1024 * 1024)
    return budget, cap


def _pick_tiles(N, C_in, C_out, L_pad, in_isz, out_isz, budget_bytes):
    """Pick (n_blk, l_tile): n_blk | N, l_tile a lane-dense divisor of L_pad.

    Targets ~_TARGET_X_BYTES of x per grid step while keeping the worst-case
    per-step VMEM footprint (double-buffered x and out, f32 temporaries,
    resident weights) under the generation-aware budget.
    """
    l_cands = [l for l in range(128, L_pad + 1, 128) if L_pad % l == 0]
    if not l_cands:
        l_cands = [L_pad]
    n_cands = [n for n in range(1, N + 1) if N % n == 0 and n <= _MAX_N_BLK]
    resident = C_out * C_in * 4 + 8 * C_out * 4 + (1 << 16)

    def footprint(n_blk, l_tile):
        x_blk = n_blk * C_in * l_tile * in_isz
        o_blk = n_blk * C_out * l_tile * out_isz
        tmp = (2 * C_out * l_tile * 4      # f32 y + scaled/relu temp (apply / conv-stats)
               + C_in * l_tile * 4         # f32 x slab (gram-stats)
               + C_in * C_in * 4)          # Gram tile
        return 2 * x_blk + 2 * o_blk + tmp + resident

    best_key, best_cfg = None, (1, l_cands[0])
    for n_blk in n_cands:
        for l_tile in l_cands:
            if footprint(n_blk, l_tile) > budget_bytes:
                continue
            x_blk = n_blk * C_in * l_tile * in_isz
            key = (min(x_blk, _TARGET_X_BYTES), l_tile, n_blk)
            if best_key is None or key > best_key:
                best_key, best_cfg = key, (n_blk, l_tile)
    return best_cfg


def _conv1x1(w, x):
    """(C_out, C_in) x (C_in, L_tile) -> (C_out, L_tile) with f32 accumulation."""
    c_in = w.shape[1]
    if c_in <= 8 and w.dtype == jnp.float32 and x.dtype == jnp.float32:
        # Tiny f32 contraction: a few broadcast FMAs on the VPU beat a <5%-utilized
        # MXU pass.  bf16 (or any non-f32) inputs always take the MXU branch —
        # v5e has no bf16 VALU and the matmul hides under the HBM-bound pipeline.
        y = w[:, 0:1] * x[0:1, :]
        for c in range(1, c_in):
            y = y + w[:, c:c + 1] * x[c:c + 1, :]
        return y
    if w.dtype != x.dtype:
        ct = jnp.promote_types(w.dtype, x.dtype)
        w = w.astype(ct)
        x = x.astype(ct)
    return jnp.dot(w, x, preferred_element_type=jnp.float32)


# ---------------------------------------------------------------------------
# pass 1a: x-side moments (Gram) — per-tile work independent of C_out
# ---------------------------------------------------------------------------
def _stats_gram_kernel(x_ref, s_ref, g_ref):
    # x_ref: (n_blk, C_in, l_tile); s_ref: (C_in, 1) f32; g_ref: (C_in, C_in) f32
    @pl.when(pl.program_id(1) == 0)
    def _init():
        s_ref[...] = jnp.zeros_like(s_ref)
        g_ref[...] = jnp.zeros_like(g_ref)

    for n in range(x_ref.shape[0]):
        xf = x_ref[n].astype(jnp.float32)                    # (C_in, l_tile)
        s_ref[...] += jnp.sum(xf, axis=1, keepdims=True)
        g_ref[...] += lax.dot_general(                       # x @ x.T on the MXU
            xf, xf, dimension_numbers=(((1,), (1,)), ((), ())),
            preferred_element_type=jnp.float32)


# ---------------------------------------------------------------------------
# pass 1b: conv-recompute moments (for C_in >> C_out)
# ---------------------------------------------------------------------------
def _stats_conv_kernel(x_ref, w_ref, sum_ref, ssq_ref):
    # x_ref: (n_blk, C_in, l_tile); sum/ssq: (C_out, 1) f32
    @pl.when(pl.program_id(1) == 0)
    def _init():
        sum_ref[...] = jnp.zeros_like(sum_ref)
        ssq_ref[...] = jnp.zeros_like(ssq_ref)

    w = w_ref[...]
    for n in range(x_ref.shape[0]):
        y = _conv1x1(w, x_ref[n])                            # (C_out, l_tile) f32
        sum_ref[...] += jnp.sum(y, axis=1, keepdims=True)
        ssq_ref[...] += jnp.sum(y * y, axis=1, keepdims=True)


# ---------------------------------------------------------------------------
# pass 2: conv (recomputed) + scale/shift + relu, lane-dense NCL output
# ---------------------------------------------------------------------------
def _apply_kernel(x_ref, w_ref, scale_ref, shift_ref, o_ref):
    w = w_ref[...]
    scale = scale_ref[...]                                   # (C_out, 1) f32
    shift = shift_ref[...]
    for n in range(x_ref.shape[0]):
        y = _conv1x1(w, x_ref[n])                            # (C_out, l_tile) f32
        o_ref[n] = jnp.maximum(y * scale + shift, 0.0).astype(o_ref.dtype)


def conv_norm_act(x, conv_weight, bn_weight, bn_bias):
    """x: (N, C_in, L); conv_weight: (C_out, C_in, 1); bn_weight/bn_bias: (C_out,)."""
    N, C_in, L = x.shape
    C_out = conv_weight.shape[0]
    M = N * L

    w2 = conv_weight.reshape(C_out, C_in)
    w2f = w2.astype(jnp.float32)
    g2 = bn_weight.reshape(C_out, 1).astype(jnp.float32)
    b2 = bn_bias.reshape(C_out, 1).astype(jnp.float32)

    # Lane-dense padding of L (zero columns add nothing to the moments).
    L_pad = ((L + 127) // 128) * 128
    x_p = x if L_pad == L else jnp.pad(x, ((0, 0), (0, 0), (0, L_pad - L)))

    budget, cap = _vmem_budget()
    vmem_limit = int(min(cap * 0.9, cap - (4 << 20)))
    vmem_limit = max(vmem_limit, 32 << 20)

    in_isz = jnp.dtype(x.dtype).itemsize
    n_blk, l_tile = _pick_tiles(N, C_in, C_out, L_pad, in_isz, in_isz, budget)
    grid = (N // n_blk, L_pad // l_tile)

    x_spec = pl.BlockSpec((n_blk, C_in, l_tile), lambda n, l: (n, 0, l))
    w_spec = pl.BlockSpec((C_out, C_in), lambda n, l: (0, 0))

    # ---- pass 1: batch statistics (per-N-block partials) -------------------
    use_gram = (C_in <= 2 * C_out) and (C_in <= 1024)
    if use_gram:
        s_parts, g_parts = pl.pallas_call(
            _stats_gram_kernel,
            out_shape=(jax.ShapeDtypeStruct((grid[0], C_in, 1), jnp.float32),
                       jax.ShapeDtypeStruct((grid[0], C_in, C_in), jnp.float32)),
            grid=grid,
            in_specs=[x_spec],
            out_specs=(pl.BlockSpec((None, C_in, 1), lambda n, l: (n, 0, 0)),
                       pl.BlockSpec((None, C_in, C_in), lambda n, l: (n, 0, 0))),
            compiler_params=pltpu.CompilerParams(
                dimension_semantics=("parallel", "arbitrary"),
                vmem_limit_bytes=vmem_limit),
        )(x_p)
        s_tot = jnp.sum(s_parts, axis=0)                       # (C_in, 1)
        g_tot = jnp.sum(g_parts, axis=0)                       # (C_in, C_in)
        sum_y = w2f @ s_tot                                    # (C_out, 1)
        ssq_y = jnp.sum((w2f @ g_tot) * w2f, axis=1, keepdims=True)
    else:
        sum_parts, ssq_parts = pl.pallas_call(
            _stats_conv_kernel,
            out_shape=(jax.ShapeDtypeStruct((grid[0], C_out, 1), jnp.float32),
                       jax.ShapeDtypeStruct((grid[0], C_out, 1), jnp.float32)),
            grid=grid,
            in_specs=[x_spec, w_spec],
            out_specs=(pl.BlockSpec((None, C_out, 1), lambda n, l: (n, 0, 0)),
                       pl.BlockSpec((None, C_out, 1), lambda n, l: (n, 0, 0))),
            compiler_params=pltpu.CompilerParams(
                dimension_semantics=("parallel", "arbitrary"),
                vmem_limit_bytes=vmem_limit),
        )(x_p, w2)
        sum_y = jnp.sum(sum_parts, axis=0)
        ssq_y = jnp.sum(ssq_parts, axis=0)

    # Tiny BN fold in plain JAX (scale = gamma*rsqrt(var+eps), shift = beta - mean*scale).
    inv_m = 1.0 / float(M)
    mean = sum_y * inv_m
    var = jnp.maximum(ssq_y * inv_m - mean * mean, 0.0)        # guard cancellation
    scale = g2 * lax.rsqrt(var + _BN_EPS)
    shift = b2 - mean * scale

    # ---- pass 2: conv (recomputed) + scale/shift + relu --------------------
    out_p = pl.pallas_call(
        _apply_kernel,
        out_shape=jax.ShapeDtypeStruct((N, C_out, L_pad), x.dtype),
        grid=grid,
        in_specs=[x_spec,
                  w_spec,
                  pl.BlockSpec((C_out, 1), lambda n, l: (0, 0)),
                  pl.BlockSpec((C_out, 1), lambda n, l: (0, 0))],
        out_specs=pl.BlockSpec((n_blk, C_out, l_tile), lambda n, l: (n, 0, l)),
        compiler_params=pltpu.CompilerParams(
            dimension_semantics=("parallel", "parallel"),
            vmem_limit_bytes=vmem_limit),
    )(x_p, w2, scale, shift)

    return out_p[:, :, :L] if L_pad != L else out_p


def _reference(x, conv_weight, bn_weight, bn_bias):
    C_out = conv_weight.shape[0]
    y = jnp.einsum("oc,ncl->nol", conv_weight.reshape(C_out, -1), x)
    mean = y.mean(axis=(0, 2), keepdims=True)
    var = ((y - mean) ** 2).mean(axis=(0, 2), keepdims=True)
    y_hat = (y - mean) / jnp.sqrt(var + _BN_EPS)
    y_bn = y_hat * bn_weight.reshape(1, -1, 1) + bn_bias.reshape(1, -1, 1)
    return jnp.maximum(y_bn, 0.0)


def _run_case(key, N, C_in, C_out, L):
    kx, kw, kg, kb = jax.random.split(key, 4)
    x = jax.random.normal(kx, (N, C_in, L), dtype=jnp.float32)
    conv_weight = 0.1 * jax.random.normal(kw, (C_out, C_in, 1), dtype=jnp.float32)
    bn_weight = 1.0 + 0.05 * jax.random.normal(kg, (C_out,), dtype=jnp.float32)
    bn_bias = 0.05 * jax.random.normal(kb, (C_out,), dtype=jnp.float32)

    out = jax.block_until_ready(conv_norm_act(x, conv_weight, bn_weight, bn_bias))
    ref = _reference(x, conv_weight, bn_weight, bn_bias)
    assert out.shape == (N, C_out, L), out.shape
    err = float(jnp.abs(out - ref).max())
    assert jnp.allclose(out, ref, atol=1e-4, rtol=1e-4), err


if __name__ == "__main__":
    key = jax.random.PRNGKey(0)
    k1, k2 = jax.random.split(key)
    _run_case(k1, N=2, C_in=4, C_out=8, L=16)    # Gram-stats path (C_in <= 2*C_out)
    _run_case(k2, N=2, C_in=32, C_out=8, L=48)   # conv-recompute stats path + MXU conv
    # TODO(synk): BatchNorm running_mean/running_var (momentum) buffer updates are
    # training-state side effects of the PyTorch module, not part of the returned
    # tensor; omitted here.
    print("KERNEL_OK")
</pallas_src>

<mosaic_0001>
module attributes {stable_mosaic.version = 11 : i64} {
  func.func @_stats_gram_kernel(%arg0: i32, %arg1: i32, %arg2: memref<2x4x128xf32, #tpu.memory_space<vmem>>, %arg3: memref<1x4x1xf32, #tpu.memory_space<vmem>>, %arg4: memref<1x4x4xf32, #tpu.memory_space<vmem>>) attributes {dimension_semantics = [#tpu.dimension_semantics<parallel>, #tpu.dimension_semantics<arbitrary>], iteration_bounds = array<i64: 1, 1>, scalar_prefetch = 0 : i64, scratch_operands = 0 : i64, tpu.core_type = #tpu.core_type<tc>, window_params = [{transform_indices = @transform_0, window_bounds = array<i64: 2, 4, 128>}, {transform_indices = @transform_1, window_bounds = array<i64: 1, 4, 1>}, {transform_indices = @transform_2, window_bounds = array<i64: 1, 4, 4>}]} {
    %c0_i32 = arith.constant 0 : i32
    %0 = arith.cmpi eq, %arg1, %c0_i32 : i32
    %1 = arith.extui %0 : i1 to i32
    %c0_i32_0 = arith.constant 0 : i32
    %2 = arith.cmpi ne, %1, %c0_i32_0 : i32
    scf.if %2 {
      %cst_32 = arith.constant 0.000000e+00 : f32
      %37 = vector.broadcast %cst_32 : f32 to vector<4x1xf32>
      %c0_33 = arith.constant 0 : index
      %c0_34 = arith.constant 0 : index
      %c0_35 = arith.constant 0 : index
      %38 = vector.load %arg3[%c0_33, %c0_34, %c0_35] : memref<1x4x1xf32, #tpu.memory_space<vmem>>, vector<1x4x1xf32>
      %39 = vector.shape_cast %38 : vector<1x4x1xf32> to vector<4x1xf32>
      %40 = vector.shape_cast %37 : vector<4x1xf32> to vector<1x4x1xf32>
      tpu.vector_store %arg3[%c0_33, %c0_34, %c0_35], %40 {strides = array<i32>} : memref<1x4x1xf32, #tpu.memory_space<vmem>>, vector<1x4x1xf32>,
      %cst_36 = arith.constant 0.000000e+00 : f32
      %41 = vector.broadcast %cst_36 : f32 to vector<4x4xf32>
      %c0_37 = arith.constant 0 : index
      %c0_38 = arith.constant 0 : index
      %c0_39 = arith.constant 0 : index
      %42 = vector.load %arg4[%c0_37, %c0_38, %c0_39] : memref<1x4x4xf32, #tpu.memory_space<vmem>>, vector<1x4x4xf32>
      %43 = vector.shape_cast %42 : vector<1x4x4xf32> to vector<4x4xf32>
      %44 = vector.shape_cast %41 : vector<4x4xf32> to vector<1x4x4xf32>
      tpu.vector_store %arg4[%c0_37, %c0_38, %c0_39], %44 {strides = array<i32>} : memref<1x4x4xf32, #tpu.memory_space<vmem>>, vector<1x4x4xf32>,
    } else {
    }
    %c0 = arith.constant 0 : index
    %c0_1 = arith.constant 0 : index
    %c0_2 = arith.constant 0 : index
    %3 = vector.load %arg2[%c0, %c0_1, %c0_2] : memref<2x4x128xf32, #tpu.memory_space<vmem>>, vector<1x4x128xf32>
    %4 = vector.shape_cast %3 : vector<1x4x128xf32> to vector<4x128xf32>
    %c0_3 = arith.constant 0 : index
    %c0_4 = arith.constant 0 : index
    %c0_5 = arith.constant 0 : index
    %5 = vector.load %arg3[%c0_3, %c0_4, %c0_5] : memref<1x4x1xf32, #tpu.memory_space<vmem>>, vector<1x4x1xf32>
    %6 = vector.shape_cast %5 : vector<1x4x1xf32> to vector<4x1xf32>
    %cst = arith.constant dense<0.000000e+00> : vector<4xf32>
    %7 = vector.multi_reduction <add>, %4, %cst [1] : vector<4x128xf32> to vector<4xf32>
    %8 = vector.shape_cast %7 : vector<4xf32> to vector<4x1xf32>
    %9 = arith.addf %6, %8 : vector<4x1xf32>
    %c0_6 = arith.constant 0 : index
    %c0_7 = arith.constant 0 : index
    %c0_8 = arith.constant 0 : index
    %10 = vector.load %arg3[%c0_6, %c0_7, %c0_8] : memref<1x4x1xf32, #tpu.memory_space<vmem>>, vector<1x4x1xf32>
    %11 = vector.shape_cast %10 : vector<1x4x1xf32> to vector<4x1xf32>
    %12 = vector.shape_cast %9 : vector<4x1xf32> to vector<1x4x1xf32>
    tpu.vector_store %arg3[%c0_6, %c0_7, %c0_8], %12 {strides = array<i32>} : memref<1x4x1xf32, #tpu.memory_space<vmem>>, vector<1x4x1xf32>,
    %c0_9 = arith.constant 0 : index
    %c0_10 = arith.constant 0 : index
    %c0_11 = arith.constant 0 : index
    %13 = vector.load %arg4[%c0_9, %c0_10, %c0_11] : memref<1x4x4xf32, #tpu.memory_space<vmem>>, vector<1x4x4xf32>
    %14 = vector.shape_cast %13 : vector<1x4x4xf32> to vector<4x4xf32>
    %cst_12 = arith.constant dense<0.000000e+00> : vector<4x4xf32>
    %15 = tpu.matmul %4, %4, %cst_12 {dimension_numbers = #tpu.dot_dimension_numbers<[1], [1], [0], [0], [0, 0, 1, 0], [], []>} : vector<4x128xf32>, vector<4x128xf32>, vector<4x4xf32> -> vector<4x4xf32>
    %16 = arith.addf %14, %15 : vector<4x4xf32>
    %c0_13 = arith.constant 0 : index
    %c0_14 = arith.constant 0 : index
    %c0_15 = arith.constant 0 : index
    %17 = vector.load %arg4[%c0_13, %c0_14, %c0_15] : memref<1x4x4xf32, #tpu.memory_space<vmem>>, vector<1x4x4xf32>
    %18 = vector.shape_cast %17 : vector<1x4x4xf32> to vector<4x4xf32>
    %19 = vector.shape_cast %16 : vector<4x4xf32> to vector<1x4x4xf32>
    tpu.vector_store %arg4[%c0_13, %c0_14, %c0_15], %19 {strides = array<i32>} : memref<1x4x4xf32, #tpu.memory_space<vmem>>, vector<1x4x4xf32>,
    %c1 = arith.constant 1 : index
    %c0_16 = arith.constant 0 : index
    %c0_17 = arith.constant 0 : index
    %20 = vector.load %arg2[%c1, %c0_16, %c0_17] : memref<2x4x128xf32, #tpu.memory_space<vmem>>, vector<1x4x128xf32>
    %21 = vector.shape_cast %20 : vector<1x4x128xf32> to vector<4x128xf32>
    %c0_18 = arith.constant 0 : index
    %c0_19 = arith.constant 0 : index
    %c0_20 = arith.constant 0 : index
    %22 = vector.load %arg3[%c0_18, %c0_19, %c0_20] : memref<1x4x1xf32, #tpu.memory_space<vmem>>, vector<1x4x1xf32>
    %23 = vector.shape_cast %22 : vector<1x4x1xf32> to vector<4x1xf32>
    %cst_21 = arith.constant dense<0.000000e+00> : vector<4xf32>
    %24 = vector.multi_reduction <add>, %21, %cst_21 [1] : vector<4x128xf32> to vector<4xf32>
    %25 = vector.shape_cast %24 : vector<4xf32> to vector<4x1xf32>
    %26 = arith.addf %23, %25 : vector<4x1xf32>
    %c0_22 = arith.constant 0 : index
    %c0_23 = arith.constant 0 : index
    %c0_24 = arith.constant 0 : index
    %27 = vector.load %arg3[%c0_22, %c0_23, %c0_24] : memref<1x4x1xf32, #tpu.memory_space<vmem>>, vector<1x4x1xf32>
    %28 = vector.shape_cast %27 : vector<1x4x1xf32> to vector<4x1xf32>
    %29 = vector.shape_cast %26 : vector<4x1xf32> to vector<1x4x1xf32>
    tpu.vector_store %arg3[%c0_22, %c0_23, %c0_24], %29 {strides = array<i32>} : memref<1x4x1xf32, #tpu.memory_space<vmem>>, vector<1x4x1xf32>,
    %c0_25 = arith.constant 0 : index
    %c0_26 = arith.constant 0 : index
    %c0_27 = arith.constant 0 : index
    %30 = vector.load %arg4[%c0_25, %c0_26, %c0_27] : memref<1x4x4xf32, #tpu.memory_space<vmem>>, vector<1x4x4xf32>
    %31 = vector.shape_cast %30 : vector<1x4x4xf32> to vector<4x4xf32>
    %cst_28 = arith.constant dense<0.000000e+00> : vector<4x4xf32>
    %32 = tpu.matmul %21, %21, %cst_28 {dimension_numbers = #tpu.dot_dimension_numbers<[1], [1], [0], [0], [0, 0, 1, 0], [], []>} : vector<4x128xf32>, vector<4x128xf32>, vector<4x4xf32> -> vector<4x4xf32>
    %33 = arith.addf %31, %32 : vector<4x4xf32>
    %c0_29 = arith.constant 0 : index
    %c0_30 = arith.constant 0 : index
    %c0_31 = arith.constant 0 : index
    %34 = vector.load %arg4[%c0_29, %c0_30, %c0_31] : memref<1x4x4xf32, #tpu.memory_space<vmem>>, vector<1x4x4xf32>
    %35 = vector.shape_cast %34 : vector<1x4x4xf32> to vector<4x4xf32>
    %36 = vector.shape_cast %33 : vector<4x4xf32> to vector<1x4x4xf32>
    tpu.vector_store %arg4[%c0_29, %c0_30, %c0_31], %36 {strides = array<i32>} : memref<1x4x4xf32, #tpu.memory_space<vmem>>, vector<1x4x4xf32>,
    return
  }
  func.func @transform_0(%arg0: i32, %arg1: i32) -> (i32, i32, i32) {
    %c0_i32 = arith.constant 0 : i32
    %c0_i32_0 = arith.constant 0 : i32
    return %arg0, %c0_i32, %arg1 : i32, i32, i32
  }
  func.func @transform_1(%arg0: i32, %arg1: i32) -> (i32, i32, i32) {
    %c0_i32 = arith.constant 0 : i32
    %c0_i32_0 = arith.constant 0 : i32
    %c0_i32_1 = arith.constant 0 : i32
    return %arg0, %c0_i32, %c0_i32_0 : i32, i32, i32
  }
  func.func @transform_2(%arg0: i32, %arg1: i32) -> (i32, i32, i32) {
    %c0_i32 = arith.constant 0 : i32
    %c0_i32_0 = arith.constant 0 : i32
    %c0_i32_1 = arith.constant 0 : i32
    return %arg0, %c0_i32, %c0_i32_0 : i32, i32, i32
  }
}

</mosaic_0001>

<llo_original>
// kernel: tpu_custom_call.1
$region0: #{tpu_custom_call.1}
  #allocation0 [shape = 'u32[]', space=smem, size = 0x4, offset = 0x4, fixed_abs, tag = 'smem constant byte address 0x4 - core index']
  #allocation1 [shape = 'u32[144,128]{1,0:T(1,128)}', space=vmem, size = 0x12000, scoped, tag = 'internal scratch']
  %s0 = inlined_call_operand.hbm [shape: f32[2,4,128], index: 0, kind: input, shape index: {}]
  %s1 = inlined_call_operand.vmem [shape: f32[1,4,1], index: 1, kind: output, shape index: {0}]
  %s2 = inlined_call_operand.hbm [shape: f32[1,4,4], index: 2, kind: output, shape index: {1}]
  %3 = xla_tuple %s1, %s2
  %s4 = sld [smem:[#allocation0]]
  $region30: #{tpu_custom_call.1} parent=0
    _
  %s6 = ssub.s32 1, %s4
  %s7 = scalar_select 0, %s6, %s4
  $region1: #{tpu_custom_call.1} parent=0
    #allocation2 [shape = 'u8[4096]{0}', space=vmem, size = 0x1000, scoped, tag = 'input window, operand 0, single buffered']
    #allocation3 [shape = 's32[1]{0}', space=sflag, size = 0x4, scoped, tag = 'scoped memory for tpu_custom_call.1']
    #allocation4 [shape = 's32[1]{0}', space=sflag, size = 0x4, scoped, tag = 'scoped memory for tpu_custom_call.1']
    #allocation5 [shape = 'u8[2048]{0}', space=vmem, size = 0x800, scoped, tag = 'output window, operand 1, single buffered']
    %8 = vsyncpa [#allocation3], 0
    %9 = vsyncpa [#allocation4], 0
    // Predicated region
    $region2: #{tpu_custom_call.1} parent=1 // pred_check
      _
    $region3: #{tpu_custom_call.1} parent=1 // pred_check_branch
      %11 = sbr.rel (0) target = $region5
    $region4: #{tpu_custom_call.1} parent=1 // pred_region
      %s13 = ssub.s32 128, 128
      %14 = vsyncadd [#allocation3], %s13
      %s15 = sshll.u32 [#allocation2], 4
      %s16 = int_to_ptr.vmem [resolvable:$true] %s15
      %21 = dma.hbm_to_vmem [thread:$0]  %s0, 128, %s16, [#allocation3], 64, 64, 4
    $region5: #{tpu_custom_call.1} parent=1 // pred_fallthru
      _
    // Predicated region
    $region6: #{tpu_custom_call.1} parent=1 // pred_check
      _
    $region7: #{tpu_custom_call.1} parent=1 // pred_check_branch
      %23 = sbr.rel (0) target = $region9
    $region8: #{tpu_custom_call.1} parent=1 // pred_region
      %24 = dma.done [#allocation3], 128
    $region9: #{tpu_custom_call.1} parent=1 // pred_fallthru
      _
    %p25 = scmp.eq.s32.totalorder 0, 0
    // Predicated region
    $region10: #{tpu_custom_call.1} parent=1 // pred_check
      %p26 = pneg %p25
    $region11: #{tpu_custom_call.1} parent=1 // pred_check_branch
      %28 = sbr.rel (%p26) target = $region13
    $region12: #{tpu_custom_call.1} parent=1 // pred_region
      %vm29 = vcmask 3072
      %30 = vst.msk [vmem:[%s1] sm:$0xf] %vm29, 0.0
      %vm31 = vcmask 27648
      %32 = vst.msk [vmem:[#allocation5] sm:$0xf] %vm31, 0.0
    $region13: #{tpu_custom_call.1} parent=1 // pred_fallthru
      _
    %v33 = vld [vmem:[#allocation2] sm:$0xf]
    %v34 = vld [vmem:[%s1] sm:$0xf]
    %vm35 = vcmask 1043456
    %v36 = vsel %vm35, %v33, 0.0
    %37 = vadd.xlane.f32.xlu0 %v36
    %v38 = vpop.xlane.xlu0 %37
    %v39 = vadd.f32 %v34, %v38
    %vm40 = vcmask 3072
    %41 = vst.msk [vmem:[%s1] sm:$0xf] %vm40, %v39
    %v42 = vld [vmem:[#allocation5] sm:$0xf]
    %43 = vmatprep.subr.mxu0 0.0
    %44 = vmatpush1.xpose.msra.mxu0 %v33
    %45 = vmatprep.subr.mxu0 0.0
    %46 = vmatpush1.xpose.msra.mxu0 0.0
    %47 = vmatprep.subr.mxu0 0.0
    %48 = vmatpush1.xpose.msra.mxu0 0.0
    %49 = vmatprep.subr.mxu0 0.0
    %50 = vmatpush1.xpose.msra.mxu0 0.0
    %51 = vmatprep.subr.mxu0 0.0
    %52 = vmatpush1.xpose.msra.mxu0 0.0
    %53 = vmatprep.subr.mxu0 0.0
    %54 = vmatpush1.xpose.msra.mxu0 0.0
    %55 = vmatprep.subr.mxu0 0.0
    %56 = vmatpush1.xpose.msra.mxu0 0.0
    %57 = vmatprep.subr.mxu0 0.0
    %58 = vmatpush1.xpose.msra.mxu0 0.0
    %59 = vmatprep.subr.mxu0 0.0
    %60 = vmatpush1.xpose.msra.mxu0 0.0
    %61 = vmatprep.subr.mxu0 0.0
    %62 = vmatpush1.xpose.msra.mxu0 0.0
    %63 = vmatprep.subr.mxu0 0.0
    %64 = vmatpush1.xpose.msra.mxu0 0.0
    %65 = vmatprep.subr.mxu0 0.0
    %66 = vmatpush1.xpose.msra.mxu0 0.0
    %67 = vmatprep.subr.mxu0 0.0
    %68 = vmatpush1.xpose.msra.mxu0 0.0
    %69 = vmatprep.subr.mxu0 0.0
    %70 = vmatpush1.xpose.msra.mxu0 0.0
    %71 = vmatprep.subr.mxu0 0.0
    %72 = vmatpush1.xpose.msra.mxu0 0.0
    %73 = vmatprep.subr.mxu0 0.0
    %74 = vmatpush1.xpose.msra.mxu0 0.0
    %75 = vmatprep.subr.mxu0 0.0
    %76 = vmatpush1.xpose.msra.mxu0 0.0
    %77 = vmatprep.subr.mxu0 0.0
    %78 = vmatpush1.xpose.msra.mxu0 0.0
    %79 = vmatprep.subr.mxu0 0.0
    %80 = vmatpush1.xpose.msra.mxu0 0.0
    %81 = vmatprep.subr.mxu0 0.0
    %82 = vmatpush1.xpose.msra.mxu0 0.0
    %83 = vmatprep.subr.mxu0 0.0
    %84 = vmatpush1.xpose.msra.mxu0 0.0
    %85 = vmatprep.subr.mxu0 0.0
    %86 = vmatpush1.xpose.msra.mxu0 0.0
    %87 = vmatprep.subr.mxu0 0.0
    %88 = vmatpush1.xpose.msra.mxu0 0.0
    %89 = vmatprep.subr.mxu0 0.0
    %90 = vmatpush1.xpose.msra.mxu0 0.0
    %91 = vmatprep.subr.mxu0 0.0
    %92 = vmatpush1.xpose.msra.mxu0 0.0
    %93 = vmatprep.subr.mxu0 0.0
    %94 = vmatpush1.xpose.msra.mxu0 0.0
    %95 = vmatprep.subr.mxu0 0.0
    %96 = vmatpush1.xpose.msra.mxu0 0.0
    %97 = vmatprep.subr.mxu0 0.0
    %98 = vmatpush1.xpose.msra.mxu0 0.0
    %99 = vmatprep.subr.mxu0 0.0
    %100 = vmatpush1.xpose.msra.mxu0 0.0
    %101 = vmatprep.subr.mxu0 0.0
    %102 = vmatpush1.xpose.msra.mxu0 0.0
    %103 = vmatprep.subr.mxu0 0.0
    %104 = vmatpush1.xpose.msra.mxu0 0.0
    %105 = vmatprep.subr.mxu0 0.0
    %106 = vmatpush1.xpose.msra.mxu0 0.0
    %107 = vmatprep.mubr.f32.mxu0 0.0
    %108 = vmatmul.mubr.f32.gmra.mrb[0].mxu0 %v33
    %v109 = vpop.f32.mrb[0].mxu0
    %v110 = vadd.f32 0.0, %v109
    %v111 = vpop.f32.mrb[0].mxu0
    %112 = vdwg.mxu0
    %v113 = vadd.f32 %v42, %v110
    %vm114 = vcmask 27648
    %115 = vst.msk [vmem:[#allocation5] sm:$0xf] %vm114, %v113
    %s116 = scalar_lea.vmem [#allocation2], 4
    %v117 = vld [vmem:[%s116] sm:$0xf]
    %v118 = vld [vmem:[%s1] sm:$0xf]
    %v119 = vsel %vm35, %v117, 0.0
    %120 = vadd.xlane.f32.xlu0 %v119
    %v121 = vpop.xlane.xlu0 %120
    %v122 = vadd.f32 %v118, %v121
    %123 = vst.msk [vmem:[%s1] sm:$0xf] %vm40, %v122
    %v124 = vld [vmem:[#allocation5] sm:$0xf]
    %125 = vmatprep.subr.mxu0 0.0
    %126 = vmatpush1.xpose.msra.mxu0 %v117
    %127 = vmatprep.subr.mxu0 0.0
    %128 = vmatpush1.xpose.msra.mxu0 0.0
    %129 = vmatprep.subr.mxu0 0.0
    %130 = vmatpush1.xpose.msra.mxu0 0.0
    %131 = vmatprep.subr.mxu0 0.0
    %132 = vmatpush1.xpose.msra.mxu0 0.0
    %133 = vmatprep.subr.mxu0 0.0
    %134 = vmatpush1.xpose.msra.mxu0 0.0
    %135 = vmatprep.subr.mxu0 0.0
    %136 = vmatpush1.xpose.msra.mxu0 0.0
    %137 = vmatprep.subr.mxu0 0.0
    %138 = vmatpush1.xpose.msra.mxu0 0.0
    %139 = vmatprep.subr.mxu0 0.0
    %140 = vmatpush1.xpose.msra.mxu0 0.0
    %141 = vmatprep.subr.mxu0 0.0
    %142 = vmatpush1.xpose.msra.mxu0 0.0
    %143 = vmatprep.subr.mxu0 0.0
    %144 = vmatpush1.xpose.msra.mxu0 0.0
    %145 = vmatprep.subr.mxu0 0.0
    %146 = vmatpush1.xpose.msra.mxu0 0.0
    %147 = vmatprep.subr.mxu0 0.0
    %148 = vmatpush1.xpose.msra.mxu0 0.0
    %149 = vmatprep.subr.mxu0 0.0
    %150 = vmatpush1.xpose.msra.mxu0 0.0
    %151 = vmatprep.subr.mxu0 0.0
    %152 = vmatpush1.xpose.msra.mxu0 0.0
    %153 = vmatprep.subr.mxu0 0.0
    %154 = vmatpush1.xpose.msra.mxu0 0.0
    %155 = vmatprep.subr.mxu0 0.0
    %156 = vmatpush1.xpose.msra.mxu0 0.0
    %157 = vmatprep.subr.mxu0 0.0
    %158 = vmatpush1.xpose.msra.mxu0 0.0
    %159 = vmatprep.subr.mxu0 0.0
    %160 = vmatpush1.xpose.msra.mxu0 0.0
    %161 = vmatprep.subr.mxu0 0.0
    %162 = vmatpush1.xpose.msra.mxu0 0.0
    %163 = vmatprep.subr.mxu0 0.0
    %164 = vmatpush1.xpose.msra.mxu0 0.0
    %165 = vmatprep.subr.mxu0 0.0
    %166 = vmatpush1.xpose.msra.mxu0 0.0
    %167 = vmatprep.subr.mxu0 0.0
    %168 = vmatpush1.xpose.msra.mxu0 0.0
    %169 = vmatprep.subr.mxu0 0.0
    %170 = vmatpush1.xpose.msra.mxu0 0.0
    %171 = vmatprep.subr.mxu0 0.0
    %172 = vmatpush1.xpose.msra.mxu0 0.0
    %173 = vmatprep.subr.mxu0 0.0
    %174 = vmatpush1.xpose.msra.mxu0 0.0
    %175 = vmatprep.subr.mxu0 0.0
    %176 = vmatpush1.xpose.msra.mxu0 0.0
    %177 = vmatprep.subr.mxu0 0.0
    %178 = vmatpush1.xpose.msra.mxu0 0.0
    %179 = vmatprep.subr.mxu0 0.0
    %180 = vmatpush1.xpose.msra.mxu0 0.0
    %181 = vmatprep.subr.mxu0 0.0
    %182 = vmatpush1.xpose.msra.mxu0 0.0
    %183 = vmatprep.subr.mxu0 0.0
    %184 = vmatpush1.xpose.msra.mxu0 0.0
    %185 = vmatprep.subr.mxu0 0.0
    %186 = vmatpush1.xpose.msra.mxu0 0.0
    %187 = vmatprep.subr.mxu0 0.0
    %188 = vmatpush1.xpose.msra.mxu0 0.0
    %189 = vmatprep.mubr.f32.mxu0 0.0
    %190 = vmatmul.mubr.f32.gmra.mrb[0].mxu0 %v117
    %v191 = vpop.f32.mrb[0].mxu0
    %v192 = vadd.f32 0.0, %v191
    %v193 = vpop.f32.mrb[0].mxu0
    %194 = vdwg.mxu0
    %v195 = vadd.f32 %v124, %v192
    %196 = vst.msk [vmem:[#allocation5] sm:$0xf] %vm114, %v195
    // Predicated region
    $region14: #{tpu_custom_call.1} parent=1 // pred_check
      _
    $region15: #{tpu_custom_call.1} parent=1 // pred_check_branch
      %198 = sbr.rel (0) target = $region17
    $region16: #{tpu_custom_call.1} parent=1 // pred_region
      _
    $region17: #{tpu_custom_call.1} parent=1 // pred_fallthru
      _
    // Predicated region
    $region18: #{tpu_custom_call.1} parent=1 // pred_check
      _
    $region19: #{tpu_custom_call.1} parent=1 // pred_check_branch
      %200 = sbr.rel (0) target = $region21
    $region20: #{tpu_custom_call.1} parent=1 // pred_region
      %s202 = ssub.s32 64, 64
      %203 = vsyncadd [#allocation4], %s202
      %s205 = sshll.u32 [#allocation5], 4
      %s206 = int_to_ptr.vmem [resolvable:$true] %s205
      %208 = dma.vmem_to_hbm [thread:$0]  %s206, 64, %s2, [#allocation4]
    $region21: #{tpu_custom_call.1} parent=1 // pred_fallthru
      _
    // Predicated region
    $region22: #{tpu_custom_call.1} parent=1 // pred_check
      _
    $region23: #{tpu_custom_call.1} parent=1 // pred_check_branch
      %210 = sbr.rel (0) target = $region25
    $region24: #{tpu_custom_call.1} parent=1 // pred_region
      _
    $region25: #{tpu_custom_call.1} parent=1 // pred_fallthru
      _
    // Predicated region
    $region26: #{tpu_custom_call.1} parent=1 // pred_check
      _
    $region27: #{tpu_custom_call.1} parent=1 // pred_check_branch
      %212 = sbr.rel (0) target = $region29
    $region28: #{tpu_custom_call.1} parent=1 // pred_region
      %213 = dma.done [#allocation4], 64
    $region29: #{tpu_custom_call.1} parent=1 // pred_fallthru
      _
    %214 = vsyncpa [#allocation3], 1
    %215 = vsyncpa [#allocation4], 1

</llo_original>
